<compile_context>
chip_gen: v7x
topology: tpu7x:2x2x1
jax: 0.10.0
libtpu: 0.0.40
codegen_flags: <defaults>
</compile_context>

<pallas_src>
import jax
import jax.numpy as jnp
from jax.experimental import pallas as pl
from jax.experimental.pallas import tpu as pltpu


# ---------------------------------------------------------------------------
# In-kernel math helpers
# ---------------------------------------------------------------------------
def _exact_dot(a, m):
    """f32-accurate matmul on the bf16 MXU.

    The f32 operand `a` is split into three exact bf16 chunks and accumulated
    in f32 (relative error ~2^-27 -- not bit-identical to a pure-f32 matmul,
    but far inside the 1e-5 test tolerance).  `m` must be exactly
    representable in bf16 (here its entries are 0 / +-0.5)."""
    a1 = a.astype(jnp.bfloat16)
    r1 = a - a1.astype(jnp.float32)           # exact in f32
    a2 = r1.astype(jnp.bfloat16)
    a3 = (r1 - a2.astype(jnp.float32)).astype(jnp.bfloat16)
    acc = jnp.dot(a1, m, preferred_element_type=jnp.float32)
    acc = acc + jnp.dot(a2, m, preferred_element_type=jnp.float32)
    acc = acc + jnp.dot(a3, m, preferred_element_type=jnp.float32)
    return acc


def _make_split_kernel(n_sub):
    """Kernel for the W-gridded path.

    xe_ref/xo_ref: (TM, CG) even-row / odd-row column chunks.
    m_ref:         (CM, CM) bf16 column-pair butterfly matrix (CM = CG/n_sub).
    ll/hl/lh/hh:   (TM, CG/2) sub-band output blocks (lane-dense for CG=256).
    n_sub is 1 (v6e/v7x) or 2 (v5e: halves MXU flops/byte); the remaining
    in-kernel loop is therefore at most 2 tiny iterations."""

    def kernel(xe_ref, xo_ref, m_ref, ll_ref, hl_ref, lh_ref, hh_ref):
        cm = m_ref.shape[0]
        s2 = cm // 2
        out_dtype = ll_ref.dtype
        m = m_ref[...]
        xe = xe_ref[...].astype(jnp.float32)
        xo = xo_ref[...].astype(jnp.float32)
        row_s = xe + xo                      # row-pair sum  (VPU)
        row_d = xo - xe                      # row-pair diff (VPU)
        for j in range(n_sub):               # static, <= 2 iterations
            sl_in = slice(j * cm, (j + 1) * cm)
            sl_out = slice(j * s2, (j + 1) * s2)
            # Cast hoisted to the full u/v result before slicing (review item).
            u = _exact_dot(row_s[:, sl_in], m).astype(out_dtype)
            v = _exact_dot(row_d[:, sl_in], m).astype(out_dtype)
            ll_ref[:, sl_out] = u[:, :s2]
            hl_ref[:, sl_out] = u[:, s2:]
            lh_ref[:, sl_out] = v[:, :s2]
            hh_ref[:, sl_out] = v[:, s2:]

    return kernel


def _dwt_kernel_fullwidth(x_ref, m_ref, ll_ref, hl_ref, lh_ref, hh_ref):
    """Fallback for W not divisible by 128 (small / odd widths).

    x_ref: (TM, 2*W) rows of [even image row | odd image row]."""
    w = x_ref.shape[-1] // 2
    c2 = w // 2
    out_dtype = ll_ref.dtype
    m = m_ref[...]
    x = x_ref[...].astype(jnp.float32)
    xe = x[:, :w]
    xo = x[:, w:]
    row_s = xe + xo
    row_d = xo - xe
    u = _exact_dot(row_s, m).astype(out_dtype)
    v = _exact_dot(row_d, m).astype(out_dtype)
    ll_ref[...] = u[:, :c2]
    hl_ref[...] = u[:, c2:]
    lh_ref[...] = v[:, :c2]
    hh_ref[...] = v[:, c2:]


# ---------------------------------------------------------------------------
# Host-side helpers
# ---------------------------------------------------------------------------
def _butterfly_matrix(c):
    """(C, C) matrix M with (a @ M)[:, j] = (a[2j]+a[2j+1])/2 and
    (a @ M)[:, C/2+j] = (a[2j+1]-a[2j])/2.  Entries +-0.5 are exact in bf16
    and fold dwt_init's /2 into the MXU pass."""
    c2 = c // 2
    j = jnp.arange(c2)
    m = jnp.zeros((c, c), jnp.float32)
    m = m.at[2 * j, j].set(0.5)
    m = m.at[2 * j + 1, j].set(0.5)
    m = m.at[2 * j, c2 + j].set(-0.5)
    m = m.at[2 * j + 1, c2 + j].set(0.5)
    return m.astype(jnp.bfloat16)


def _tpu_config():
    """Generation-aware tuning knobs (trace-time only)."""
    kind = ""
    try:
        dev = jax.devices()[0]
        if dev.platform == "tpu":
            kind = dev.device_kind.lower()
    except Exception:
        pass
    is_v5e = ("v5" in kind) and (("lite" in kind) or ("v5e" in kind))
    is_v6e = "v6" in kind
    if is_v5e:
        # Low MXU/HBM crossover: halve the MXU sub-chunk; 128 MiB VMEM.
        return {"mxu_chunk": 128, "budget": 20 << 20, "vmem_limit": 64 << 20}
    if is_v6e:
        # Plenty of MXU headroom at 256; 128 MiB VMEM -> roomier tiles.
        return {"mxu_chunk": 256, "budget": 20 << 20, "vmem_limit": 64 << 20}
    # v7x (64 MiB VMEM per TC) and anything unrecognised: stay conservative.
    return {"mxu_chunk": 256, "budget": 10 << 20, "vmem_limit": 32 << 20}


def _pick_block_rows(r, chunk_w, n_wblk, budget, mat_bytes):
    """Rows per grid step, sized from a VMEM budget (double-buffered in/out
    blocks + in-kernel f32/bf16 temps ~ 80 bytes per row per chunk element).
    Prefers (a) an exact divisor of r with an even total step count, then
    (b) an even total step count, then (c) an exact divisor -- so v7x's two
    TensorCores get a balanced split of the parallel grid."""
    bytes_per_row = 80 * chunk_w
    tm = int(max(0, budget - mat_bytes) // bytes_per_row)
    tm = max(8, min(tm, 2048))
    tm = (tm // 8) * 8
    if tm >= r:
        return r

    def steps(cand):
        return (-(-r // cand)) * n_wblk

    lo = max(8, ((tm // 2) // 8) * 8)
    best_even = None
    for cand in range(tm, lo - 1, -8):
        even = steps(cand) % 2 == 0
        if even and r % cand == 0:
            return cand
        if even and best_even is None:
            best_even = cand
    if best_even is not None:
        return best_even
    for cand in range(tm, lo - 1, -8):
        if r % cand == 0:
            return cand
    return tm


def _dwt_impl(x):
    """Pallas TPU implementation of dwt_init: (B,C,H,W) -> (LL, (HL, LH, HH))."""
    b, ch, h, w = x.shape
    assert h % 2 == 0 and w % 2 == 0, "H and W must be even"
    h2, w2 = h // 2, w // 2
    r = b * ch * h2

    cfg = _tpu_config()
    out_sd = jax.ShapeDtypeStruct((r, w2), x.dtype)
    # Free view: row i of x2 = [even image row | odd image row] of pair i.
    x2 = x.reshape(r, 2 * w)

    if w % 128 == 0:
        # ---- main path: W is a grid axis, lane-dense blocks ----------------
        cg = 256 if w % 256 == 0 else 128        # grid chunk along W
        cm = min(cg, cfg["mxu_chunk"])           # MXU sub-chunk (v5e: 128)
        n_sub = cg // cm                         # 1 or 2
        n_wblk = w // cg
        mat = _butterfly_matrix(cm)
        tm = _pick_block_rows(r, cg, n_wblk, cfg["budget"], 2 * cm * cm * 2)
        grid = (pl.cdiv(r, tm), n_wblk)
        kernel = _make_split_kernel(n_sub)
        in_specs = [
            # Even image rows: columns [k*CG, (k+1)*CG) of the left half.
            pl.BlockSpec((tm, cg), lambda i, k: (i, k)),
            # Odd image rows: same columns, offset by W (= n_wblk blocks).
            pl.BlockSpec((tm, cg), lambda i, k: (i, k + n_wblk)),
            # Constant butterfly matrix: block index never changes, so it is
            # DMA'd into VMEM once and stays resident across the grid.
            pl.BlockSpec((cm, cm), lambda i, k: (0, 0)),
        ]
        out_specs = [pl.BlockSpec((tm, cg // 2), lambda i, k: (i, k))] * 4
        semantics = ("parallel", "parallel")
        args = (x2, x2, mat)
    else:
        # ---- fallback: small / odd widths (e.g. the 16x16 unit test) -------
        # Full-width blocks; fine for small W, not tuned for huge odd widths.
        mat = _butterfly_matrix(w)
        tm = _pick_block_rows(r, w, 1, cfg["budget"], 2 * w * w * 2)
        grid = (pl.cdiv(r, tm),)
        kernel = _dwt_kernel_fullwidth
        in_specs = [
            pl.BlockSpec((tm, 2 * w), lambda i: (i, 0)),
            pl.BlockSpec((w, w), lambda i: (0, 0)),
        ]
        out_specs = [pl.BlockSpec((tm, w2), lambda i: (i, 0))] * 4
        semantics = ("parallel",)
        args = (x2, mat)

    ll, hl, lh, hh = pl.pallas_call(
        kernel,
        out_shape=(out_sd, out_sd, out_sd, out_sd),
        grid_spec=pltpu.PrefetchScalarGridSpec(
            num_scalar_prefetch=0,
            grid=grid,
            in_specs=in_specs,
            out_specs=out_specs,
        ),
        compiler_params=pltpu.CompilerParams(
            dimension_semantics=semantics,
            vmem_limit_bytes=cfg["vmem_limit"],
        ),
    )(*args)

    _r = lambda a: a.reshape(b, ch, h2, w2)      # free reshape back to NCHW
    return _r(ll), (_r(hl), _r(lh), _r(hh))


dwt = jax.jit(_dwt_impl)


def dwt_ref(x):
    """Pure-JAX reference mirroring the PyTorch dwt_init exactly."""
    x01 = x[:, :, 0::2, :] / 2
    x02 = x[:, :, 1::2, :] / 2
    x1 = x01[:, :, :, 0::2]
    x2 = x02[:, :, :, 0::2]
    x3 = x01[:, :, :, 1::2]
    x4 = x02[:, :, :, 1::2]
    return (x1 + x2 + x3 + x4,
            (-x1 - x2 + x3 + x4, -x1 + x2 - x3 + x4, x1 - x2 - x3 + x4))


if __name__ == "__main__":
    # Small NCHW input consistent with the module's forward (fallback path).
    x = jax.random.normal(jax.random.PRNGKey(0), (2, 4, 16, 16), dtype=jnp.float32)
    ll, (hl, lh, hh) = dwt(x)
    jax.block_until_ready((ll, hl, lh, hh))

    ll_r, (hl_r, lh_r, hh_r) = dwt_ref(x)
    for got, want in ((ll, ll_r), (hl, hl_r), (lh, lh_r), (hh, hh_r)):
        assert got.shape == want.shape and got.dtype == want.dtype
        assert jnp.allclose(got, want, atol=1e-5, rtol=1e-5), "mismatch vs reference"

    # Larger shape: exercises the W-gridded path (CG=256 blocks, lane-dense
    # 128-wide output stores, multi-step parallel grid).
    xb = jax.random.normal(jax.random.PRNGKey(1), (1, 4, 256, 512), dtype=jnp.float32)
    llb, (hlb, lhb, hhb) = dwt(xb)
    jax.block_until_ready((llb, hlb, lhb, hhb))
    llb_r, (hlb_r, lhb_r, hhb_r) = dwt_ref(xb)
    for got, want in ((llb, llb_r), (hlb, hlb_r), (lhb, lhb_r), (hhb, hhb_r)):
        assert jnp.allclose(got, want, atol=1e-5, rtol=1e-5), "mismatch (large case)"

    print("KERNEL_OK")
</pallas_src>

<mosaic_0001>
module attributes {stable_mosaic.version = 11 : i64} {
  func.func @_dwt_kernel_fullwidth(%arg0: i32, %arg1: memref<64x32xf32, #tpu.memory_space<vmem>>, %arg2: memref<16x16xbf16, #tpu.memory_space<vmem>>, %arg3: memref<64x8xf32, #tpu.memory_space<vmem>>, %arg4: memref<64x8xf32, #tpu.memory_space<vmem>>, %arg5: memref<64x8xf32, #tpu.memory_space<vmem>>, %arg6: memref<64x8xf32, #tpu.memory_space<vmem>>) attributes {dimension_semantics = [#tpu.dimension_semantics<parallel>], iteration_bounds = array<i64: 1>, scalar_prefetch = 0 : i64, scratch_operands = 0 : i64, tpu.core_type = #tpu.core_type<tc>, window_params = [{transform_indices = @transform_0, window_bounds = array<i64: 64, 32>}, {pipeline_mode = #tpu.pipeline_mode<synchronous>, transform_indices = @transform_1, window_bounds = array<i64: 16, 16>}, {transform_indices = @transform_2, window_bounds = array<i64: 64, 8>}, {transform_indices = @transform_3, window_bounds = array<i64: 64, 8>}, {transform_indices = @transform_4, window_bounds = array<i64: 64, 8>}, {transform_indices = @transform_5, window_bounds = array<i64: 64, 8>}]} {
    %c0 = arith.constant 0 : index
    %c0_0 = arith.constant 0 : index
    %0 = vector.load %arg2[%c0, %c0_0] : memref<16x16xbf16, #tpu.memory_space<vmem>>, vector<16x16xbf16>
    %c0_1 = arith.constant 0 : index
    %c0_2 = arith.constant 0 : index
    %1 = vector.load %arg1[%c0_1, %c0_2] : memref<64x32xf32, #tpu.memory_space<vmem>>, vector<64x32xf32>
    %2 = vector.extract_strided_slice %1 {offsets = [0, 0], sizes = [64, 16], strides = [1, 1]} : vector<64x32xf32> to vector<64x16xf32>
    %3 = vector.extract_strided_slice %1 {offsets = [0, 16], sizes = [64, 16], strides = [1, 1]} : vector<64x32xf32> to vector<64x16xf32>
    %4 = arith.addf %2, %3 : vector<64x16xf32>
    %5 = arith.subf %3, %2 : vector<64x16xf32>
    %6 = arith.truncf %4 : vector<64x16xf32> to vector<64x16xbf16>
    %7 = arith.extf %6 : vector<64x16xbf16> to vector<64x16xf32>
    %8 = arith.subf %4, %7 : vector<64x16xf32>
    %9 = arith.truncf %8 : vector<64x16xf32> to vector<64x16xbf16>
    %10 = arith.extf %9 : vector<64x16xbf16> to vector<64x16xf32>
    %11 = arith.subf %8, %10 : vector<64x16xf32>
    %12 = arith.truncf %11 : vector<64x16xf32> to vector<64x16xbf16>
    %cst = arith.constant dense<0.000000e+00> : vector<64x16xf32>
    %13 = tpu.matmul %6, %0, %cst {dimension_numbers = #tpu.dot_dimension_numbers<[1], [0], [0], [1], [0, 0, 1, 1], [], []>} : vector<64x16xbf16>, vector<16x16xbf16>, vector<64x16xf32> -> vector<64x16xf32>
    %cst_3 = arith.constant dense<0.000000e+00> : vector<64x16xf32>
    %14 = tpu.matmul %9, %0, %cst_3 {dimension_numbers = #tpu.dot_dimension_numbers<[1], [0], [0], [1], [0, 0, 1, 1], [], []>} : vector<64x16xbf16>, vector<16x16xbf16>, vector<64x16xf32> -> vector<64x16xf32>
    %15 = arith.addf %13, %14 : vector<64x16xf32>
    %cst_4 = arith.constant dense<0.000000e+00> : vector<64x16xf32>
    %16 = tpu.matmul %12, %0, %cst_4 {dimension_numbers = #tpu.dot_dimension_numbers<[1], [0], [0], [1], [0, 0, 1, 1], [], []>} : vector<64x16xbf16>, vector<16x16xbf16>, vector<64x16xf32> -> vector<64x16xf32>
    %17 = arith.addf %15, %16 : vector<64x16xf32>
    %18 = arith.truncf %5 : vector<64x16xf32> to vector<64x16xbf16>
    %19 = arith.extf %18 : vector<64x16xbf16> to vector<64x16xf32>
    %20 = arith.subf %5, %19 : vector<64x16xf32>
    %21 = arith.truncf %20 : vector<64x16xf32> to vector<64x16xbf16>
    %22 = arith.extf %21 : vector<64x16xbf16> to vector<64x16xf32>
    %23 = arith.subf %20, %22 : vector<64x16xf32>
    %24 = arith.truncf %23 : vector<64x16xf32> to vector<64x16xbf16>
    %cst_5 = arith.constant dense<0.000000e+00> : vector<64x16xf32>
    %25 = tpu.matmul %18, %0, %cst_5 {dimension_numbers = #tpu.dot_dimension_numbers<[1], [0], [0], [1], [0, 0, 1, 1], [], []>} : vector<64x16xbf16>, vector<16x16xbf16>, vector<64x16xf32> -> vector<64x16xf32>
    %cst_6 = arith.constant dense<0.000000e+00> : vector<64x16xf32>
    %26 = tpu.matmul %21, %0, %cst_6 {dimension_numbers = #tpu.dot_dimension_numbers<[1], [0], [0], [1], [0, 0, 1, 1], [], []>} : vector<64x16xbf16>, vector<16x16xbf16>, vector<64x16xf32> -> vector<64x16xf32>
    %27 = arith.addf %25, %26 : vector<64x16xf32>
    %cst_7 = arith.constant dense<0.000000e+00> : vector<64x16xf32>
    %28 = tpu.matmul %24, %0, %cst_7 {dimension_numbers = #tpu.dot_dimension_numbers<[1], [0], [0], [1], [0, 0, 1, 1], [], []>} : vector<64x16xbf16>, vector<16x16xbf16>, vector<64x16xf32> -> vector<64x16xf32>
    %29 = arith.addf %27, %28 : vector<64x16xf32>
    %30 = vector.extract_strided_slice %17 {offsets = [0, 0], sizes = [64, 8], strides = [1, 1]} : vector<64x16xf32> to vector<64x8xf32>
    %c0_8 = arith.constant 0 : index
    %c0_9 = arith.constant 0 : index
    %31 = vector.load %arg3[%c0_8, %c0_9] : memref<64x8xf32, #tpu.memory_space<vmem>>, vector<64x8xf32>
    tpu.vector_store %arg3[%c0_8, %c0_9], %30 {strides = array<i32>} : memref<64x8xf32, #tpu.memory_space<vmem>>, vector<64x8xf32>,
    %32 = vector.extract_strided_slice %17 {offsets = [0, 8], sizes = [64, 8], strides = [1, 1]} : vector<64x16xf32> to vector<64x8xf32>
    %c0_10 = arith.constant 0 : index
    %c0_11 = arith.constant 0 : index
    %33 = vector.load %arg4[%c0_10, %c0_11] : memref<64x8xf32, #tpu.memory_space<vmem>>, vector<64x8xf32>
    tpu.vector_store %arg4[%c0_10, %c0_11], %32 {strides = array<i32>} : memref<64x8xf32, #tpu.memory_space<vmem>>, vector<64x8xf32>,
    %34 = vector.extract_strided_slice %29 {offsets = [0, 0], sizes = [64, 8], strides = [1, 1]} : vector<64x16xf32> to vector<64x8xf32>
    %c0_12 = arith.constant 0 : index
    %c0_13 = arith.constant 0 : index
    %35 = vector.load %arg5[%c0_12, %c0_13] : memref<64x8xf32, #tpu.memory_space<vmem>>, vector<64x8xf32>
    tpu.vector_store %arg5[%c0_12, %c0_13], %34 {strides = array<i32>} : memref<64x8xf32, #tpu.memory_space<vmem>>, vector<64x8xf32>,
    %36 = vector.extract_strided_slice %29 {offsets = [0, 8], sizes = [64, 8], strides = [1, 1]} : vector<64x16xf32> to vector<64x8xf32>
    %c0_14 = arith.constant 0 : index
    %c0_15 = arith.constant 0 : index
    %37 = vector.load %arg6[%c0_14, %c0_15] : memref<64x8xf32, #tpu.memory_space<vmem>>, vector<64x8xf32>
    tpu.vector_store %arg6[%c0_14, %c0_15], %36 {strides = array<i32>} : memref<64x8xf32, #tpu.memory_space<vmem>>, vector<64x8xf32>,
    return
  }
  func.func @transform_0(%arg0: i32) -> (i32, i32) {
    %c0_i32 = arith.constant 0 : i32
    %c0_i32_0 = arith.constant 0 : i32
    return %arg0, %c0_i32 : i32, i32
  }
  func.func @transform_1(%arg0: i32) -> (i32, i32) {
    %c0_i32 = arith.constant 0 : i32
    %c0_i32_0 = arith.constant 0 : i32
    %c0_i32_1 = arith.constant 0 : i32
    return %c0_i32, %c0_i32_0 : i32, i32
  }
  func.func @transform_2(%arg0: i32) -> (i32, i32) {
    %c0_i32 = arith.constant 0 : i32
    %c0_i32_0 = arith.constant 0 : i32
    return %arg0, %c0_i32 : i32, i32
  }
  func.func @transform_3(%arg0: i32) -> (i32, i32) {
    %c0_i32 = arith.constant 0 : i32
    %c0_i32_0 = arith.constant 0 : i32
    return %arg0, %c0_i32 : i32, i32
  }
  func.func @transform_4(%arg0: i32) -> (i32, i32) {
    %c0_i32 = arith.constant 0 : i32
    %c0_i32_0 = arith.constant 0 : i32
    return %arg0, %c0_i32 : i32, i32
  }
  func.func @transform_5(%arg0: i32) -> (i32, i32) {
    %c0_i32 = arith.constant 0 : i32
    %c0_i32_0 = arith.constant 0 : i32
    return %arg0, %c0_i32 : i32, i32
  }
}

</mosaic_0001>

<llo_original>
// kernel: _dwt_impl.1
$region0: #{_dwt_impl.1}
  #allocation0 [shape = 'u32[]', space=smem, size = 0x4, offset = 0x4, fixed_abs, tag = 'smem constant byte address 0x4 - core index']
  #allocation1 [shape = 'u32[144,128]{1,0:T(1,128)}', space=vmem, size = 0x12000, scoped, tag = 'internal scratch']
  %s0 = inlined_call_operand.vmem [shape: f32[64,32], index: 0, kind: input, shape index: {}]
  %s1 = inlined_call_operand.vmem [shape: bf16[16,16], index: 1, kind: input, shape index: {}]
  %s2 = inlined_call_operand.hbm [shape: f32[64,8], index: 2, kind: output, shape index: {0}]
  %s3 = inlined_call_operand.hbm [shape: f32[64,8], index: 3, kind: output, shape index: {1}]
  %s4 = inlined_call_operand.hbm [shape: f32[64,8], index: 4, kind: output, shape index: {2}]
  %s5 = inlined_call_operand.hbm [shape: f32[64,8], index: 5, kind: output, shape index: {3}]
  %6 = xla_tuple %s2, %s3, %s4, %s5
  %s7 = sld [smem:[#allocation0]]
  $region42: #{_dwt_impl.1} parent=0
    _
  %s9 = ssub.s32 1, %s7
  %s10 = scalar_select 0, %s9, %s7
  $region1: #{_dwt_impl.1} parent=0
    #allocation2 [shape = 'u8[32768]{0}', space=vmem, size = 0x8000, scoped, tag = 'output window, operand 0, single buffered']
    #allocation3 [shape = 's32[1]{0}', space=sflag, size = 0x4, scoped, tag = 'scoped memory for _dwt_impl.1']
    #allocation4 [shape = 'u8[32768]{0}', space=vmem, size = 0x8000, scoped, tag = 'output window, operand 1, single buffered']
    #allocation5 [shape = 's32[1]{0}', space=sflag, size = 0x4, scoped, tag = 'scoped memory for _dwt_impl.1']
    #allocation6 [shape = 'u8[32768]{0}', space=vmem, size = 0x8000, scoped, tag = 'output window, operand 2, single buffered']
    #allocation7 [shape = 'u8[32768]{0}', space=vmem, size = 0x8000, scoped, tag = 'output window, operand 3, single buffered']
    #allocation8 [shape = 's32[1]{0}', space=sflag, size = 0x4, scoped, tag = 'scoped memory for _dwt_impl.1']
    %11 = vsyncpa [#allocation3], 0
    %12 = vsyncpa [#allocation5], 0
    %13 = vsyncpa [#allocation8], 0
    // Predicated region
    $region2: #{_dwt_impl.1} parent=1 // pred_check
      _
    $region3: #{_dwt_impl.1} parent=1 // pred_check_branch
      %15 = sbr.rel (0) target = $region5
    $region4: #{_dwt_impl.1} parent=1 // pred_region
      _
    $region5: #{_dwt_impl.1} parent=1 // pred_fallthru
      _
    // Predicated region
    $region6: #{_dwt_impl.1} parent=1 // pred_check
      _
    $region7: #{_dwt_impl.1} parent=1 // pred_check_branch
      %17 = sbr.rel (0) target = $region9
    $region8: #{_dwt_impl.1} parent=1 // pred_region
      _
    $region9: #{_dwt_impl.1} parent=1 // pred_fallthru
      _
    %v19 = vld [vmem:[%s1] sm:$0xf]
    %v20 = vld [vmem:[%s1 + $0x4] sm:$0xf]
    %v21 = vld [vmem:[%s0] sm:$0xff]
    %v22 = vld [vmem:[%s0 + $0x8] sm:$0xff]
    %v23 = vld [vmem:[%s0 + $0x10] sm:$0xff]
    %v24 = vld [vmem:[%s0 + $0x18] sm:$0xff]
    %v25 = vld [vmem:[%s0 + $0x20] sm:$0xff]
    %v26 = vld [vmem:[%s0 + $0x28] sm:$0xff]
    %v27 = vld [vmem:[%s0 + $0x30] sm:$0xff]
    %v28 = vld [vmem:[%s0 + $0x38] sm:$0xff]
    %37 = vrot.lane.b32.xlu0 %v21, 112
    %v38 = vpop.permute.xlu0 %37
    %39 = vrot.lane.b32.xlu0 %v22, 112
    %v40 = vpop.permute.xlu0 %39
    %41 = vrot.lane.b32.xlu0 %v23, 112
    %v42 = vpop.permute.xlu0 %41
    %43 = vrot.lane.b32.xlu0 %v24, 112
    %v44 = vpop.permute.xlu0 %43
    %45 = vrot.lane.b32.xlu0 %v25, 112
    %v46 = vpop.permute.xlu0 %45
    %47 = vrot.lane.b32.xlu0 %v26, 112
    %v48 = vpop.permute.xlu0 %47
    %49 = vrot.lane.b32.xlu0 %v27, 112
    %v50 = vpop.permute.xlu0 %49
    %51 = vrot.lane.b32.xlu0 %v28, 112
    %v52 = vpop.permute.xlu0 %51
    %v61 = vadd.f32 %v21, %v38
    %v62 = vadd.f32 %v22, %v40
    %v63 = vadd.f32 %v23, %v42
    %v64 = vadd.f32 %v24, %v44
    %v65 = vadd.f32 %v25, %v46
    %v66 = vadd.f32 %v26, %v48
    %v67 = vadd.f32 %v27, %v50
    %v68 = vadd.f32 %v28, %v52
    %69 = vrot.lane.b32.xlu0 %v21, 16
    %v70 = vpop.permute.xlu0 %69
    %71 = vrot.lane.b32.xlu0 %v22, 16
    %v72 = vpop.permute.xlu0 %71
    %73 = vrot.lane.b32.xlu0 %v23, 16
    %v74 = vpop.permute.xlu0 %73
    %75 = vrot.lane.b32.xlu0 %v24, 16
    %v76 = vpop.permute.xlu0 %75
    %77 = vrot.lane.b32.xlu0 %v25, 16
    %v78 = vpop.permute.xlu0 %77
    %79 = vrot.lane.b32.xlu0 %v26, 16
    %v80 = vpop.permute.xlu0 %79
    %81 = vrot.lane.b32.xlu0 %v27, 16
    %v82 = vpop.permute.xlu0 %81
    %83 = vrot.lane.b32.xlu0 %v28, 16
    %v84 = vpop.permute.xlu0 %83
    %v93 = vsub.f32 %v21, %v70
    %v94 = vsub.f32 %v22, %v72
    %v95 = vsub.f32 %v23, %v74
    %v96 = vsub.f32 %v24, %v76
    %v97 = vsub.f32 %v25, %v78
    %v98 = vsub.f32 %v26, %v80
    %v99 = vsub.f32 %v27, %v82
    %v100 = vsub.f32 %v28, %v84
    %v101 = vpack.c.bf16 %v62, %v61
    %v102 = vpack.c.bf16 %v64, %v63
    %v103 = vpack.c.bf16 %v66, %v65
    %v104 = vpack.c.bf16 %v68, %v67
    %v105 = vunpack.c.l.bf16 %v101
    %v106 = vunpack.c.h.bf16 %v101
    %v107 = vunpack.c.l.bf16 %v102
    %v108 = vunpack.c.h.bf16 %v102
    %v109 = vunpack.c.l.bf16 %v103
    %v110 = vunpack.c.h.bf16 %v103
    %v111 = vunpack.c.l.bf16 %v104
    %v112 = vunpack.c.h.bf16 %v104
    %v113 = vsub.f32 %v61, %v105
    %v114 = vsub.f32 %v62, %v106
    %v115 = vsub.f32 %v63, %v107
    %v116 = vsub.f32 %v64, %v108
    %v117 = vsub.f32 %v65, %v109
    %v118 = vsub.f32 %v66, %v110
    %v119 = vsub.f32 %v67, %v111
    %v120 = vsub.f32 %v68, %v112
    %v121 = vpack.c.bf16 %v114, %v113
    %v122 = vpack.c.bf16 %v116, %v115
    %v123 = vpack.c.bf16 %v118, %v117
    %v124 = vpack.c.bf16 %v120, %v119
    %v125 = vunpack.c.l.bf16 %v121
    %v126 = vunpack.c.h.bf16 %v121
    %v127 = vunpack.c.l.bf16 %v122
    %v128 = vunpack.c.h.bf16 %v122
    %v129 = vunpack.c.l.bf16 %v123
    %v130 = vunpack.c.h.bf16 %v123
    %v131 = vunpack.c.l.bf16 %v124
    %v132 = vunpack.c.h.bf16 %v124
    %v133 = vsub.f32 %v113, %v125
    %v134 = vsub.f32 %v114, %v126
    %v135 = vsub.f32 %v115, %v127
    %v136 = vsub.f32 %v116, %v128
    %v137 = vsub.f32 %v117, %v129
    %v138 = vsub.f32 %v118, %v130
    %v139 = vsub.f32 %v119, %v131
    %v140 = vsub.f32 %v120, %v132
    %v141 = vpack.c.bf16 %v134, %v133
    %v142 = vpack.c.bf16 %v136, %v135
    %v143 = vpack.c.bf16 %v138, %v137
    %v144 = vpack.c.bf16 %v140, %v139
    %v147 = vunpack.c.l.b16 %v19
    %v148 = vunpack.c.l.b16 %v20
    %v149 = vpack.c.b16 %v148, %v147
    %vm151 = vcmask 130048
    %v153 = vsel %vm151, %v121, 0
    %v156 = vsel %vm151, %v122, 0
    %v159 = vsel %vm151, %v123, 0
    %v162 = vsel %vm151, %v124, 0
    %164 = vmatprep.subr.bf16.mxu0 0
    %165 = vmatpush1.bf16.msra.mxu0 %v149
    %166 = vmatprep.subr.bf16.mxu0 0
    %167 = vmatpush1.bf16.msra.mxu0 0
    %168 = vmatprep.subr.bf16.mxu0 0
    %169 = vmatpush1.bf16.msra.mxu0 0
    %170 = vmatprep.subr.bf16.mxu0 0
    %171 = vmatpush1.bf16.msra.mxu0 0
    %172 = vmatprep.subr.bf16.mxu0 0
    %173 = vmatpush1.bf16.msra.mxu0 0
    %174 = vmatprep.subr.bf16.mxu0 0
    %175 = vmatpush1.bf16.msra.mxu0 0
    %176 = vmatprep.subr.bf16.mxu0 0
    %177 = vmatpush1.bf16.msra.mxu0 0
    %178 = vmatprep.subr.bf16.mxu0 0
    %179 = vmatpush1.bf16.msra.mxu0 0
    %180 = vmatprep.subr.bf16.mxu0 0
    %181 = vmatpush1.bf16.msra.mxu0 0
    %182 = vmatprep.subr.bf16.mxu0 0
    %183 = vmatpush1.bf16.msra.mxu0 0
    %184 = vmatprep.subr.bf16.mxu0 0
    %185 = vmatpush1.bf16.msra.mxu0 0
    %186 = vmatprep.subr.bf16.mxu0 0
    %187 = vmatpush1.bf16.msra.mxu0 0
    %188 = vmatprep.subr.bf16.mxu0 0
    %189 = vmatpush1.bf16.msra.mxu0 0
    %190 = vmatprep.subr.bf16.mxu0 0
    %191 = vmatpush1.bf16.msra.mxu0 0
    %192 = vmatprep.subr.bf16.mxu0 0
    %193 = vmatpush1.bf16.msra.mxu0 0
    %194 = vmatprep.subr.bf16.mxu0 0
    %195 = vmatpush1.bf16.msra.mxu0 0
    %196 = vmatprep.mubr.bf16.mxu0 0
    %197 = vmatmul.mubr.bf16.gmra.mrb[0].mxu0 %v153
    %v198 = vpop.f32.mrb[0].mxu0
    %v199 = vadd.f32 0.0, %v198
    %v200 = vpop.f32.mrb[0].mxu0
    %v201 = vpop.f32.mrb[0].mxu0
    %v202 = vadd.f32 0.0, %v201
    %v203 = vpop.f32.mrb[0].mxu0
    %204 = vmatprep.mubr.bf16.mxu0 0
    %205 = vmatmul.mubr.bf16.gmra.mrb[0].mxu0 %v156
    %v206 = vpop.f32.mrb[0].mxu0
    %v207 = vadd.f32 0.0, %v206
    %v208 = vpop.f32.mrb[0].mxu0
    %v209 = vpop.f32.mrb[0].mxu0
    %v210 = vadd.f32 0.0, %v209
    %v211 = vpop.f32.mrb[0].mxu0
    %212 = vmatprep.mubr.bf16.mxu0 0
    %213 = vmatmul.mubr.bf16.gmra.mrb[0].mxu0 %v159
    %v214 = vpop.f32.mrb[0].mxu0
    %v215 = vadd.f32 0.0, %v214
    %v216 = vpop.f32.mrb[0].mxu0
    %v217 = vpop.f32.mrb[0].mxu0
    %v218 = vadd.f32 0.0, %v217
    %v219 = vpop.f32.mrb[0].mxu0
    %220 = vmatprep.mubr.bf16.mxu0 0
    %221 = vmatmul.mubr.bf16.gmra.mrb[0].mxu0 %v162
    %v222 = vpop.f32.mrb[0].mxu0
    %v223 = vadd.f32 0.0, %v222
    %v224 = vpop.f32.mrb[0].mxu0
    %v225 = vpop.f32.mrb[0].mxu0
    %v226 = vadd.f32 0.0, %v225
    %v227 = vpop.f32.mrb[0].mxu0
    %228 = vdwg.mxu0
    %v230 = vsel %vm151, %v101, 0
    %v233 = vsel %vm151, %v102, 0
    %v236 = vsel %vm151, %v103, 0
    %v239 = vsel %vm151, %v104, 0
    %241 = vmatprep.subr.bf16.mxu0 0
    %242 = vmatpush1.bf16.msra.mxu0 %v149
    %243 = vmatprep.subr.bf16.mxu0 0
    %244 = vmatpush1.bf16.msra.mxu0 0
    %245 = vmatprep.subr.bf16.mxu0 0
    %246 = vmatpush1.bf16.msra.mxu0 0
    %247 = vmatprep.subr.bf16.mxu0 0
    %248 = vmatpush1.bf16.msra.mxu0 0
    %249 = vmatprep.subr.bf16.mxu0 0
    %250 = vmatpush1.bf16.msra.mxu0 0
    %251 = vmatprep.subr.bf16.mxu0 0
    %252 = vmatpush1.bf16.msra.mxu0 0
    %253 = vmatprep.subr.bf16.mxu0 0
    %254 = vmatpush1.bf16.msra.mxu0 0
    %255 = vmatprep.subr.bf16.mxu0 0
    %256 = vmatpush1.bf16.msra.mxu0 0
    %257 = vmatprep.subr.bf16.mxu0 0
    %258 = vmatpush1.bf16.msra.mxu0 0
    %259 = vmatprep.subr.bf16.mxu0 0
    %260 = vmatpush1.bf16.msra.mxu0 0
    %261 = vmatprep.subr.bf16.mxu0 0
    %262 = vmatpush1.bf16.msra.mxu0 0
    %263 = vmatprep.subr.bf16.mxu0 0
    %264 = vmatpush1.bf16.msra.mxu0 0
    %265 = vmatprep.subr.bf16.mxu0 0
    %266 = vmatpush1.bf16.msra.mxu0 0
    %267 = vmatprep.subr.bf16.mxu0 0
    %268 = vmatpush1.bf16.msra.mxu0 0
    %269 = vmatprep.subr.bf16.mxu0 0
    %270 = vmatpush1.bf16.msra.mxu0 0
    %271 = vmatprep.subr.bf16.mxu0 0
    %272 = vmatpush1.bf16.msra.mxu0 0
    %273 = vmatprep.mubr.bf16.mxu0 0
    %274 = vmatmul.mubr.bf16.gmra.mrb[0].mxu0 %v230
    %v275 = vpop.f32.mrb[0].mxu0
    %v276 = vadd.f32 %v199, %v275
    %v277 = vpop.f32.mrb[0].mxu0
    %v278 = vpop.f32.mrb[0].mxu0
    %v279 = vadd.f32 %v202, %v278
    %v280 = vpop.f32.mrb[0].mxu0
    %281 = vmatprep.mubr.bf16.mxu0 0
    %282 = vmatmul.mubr.bf16.gmra.mrb[0].mxu0 %v233
    %v283 = vpop.f32.mrb[0].mxu0
    %v284 = vadd.f32 %v207, %v283
    %v285 = vpop.f32.mrb[0].mxu0
    %v286 = vpop.f32.mrb[0].mxu0
    %v287 = vadd.f32 %v210, %v286
    %v288 = vpop.f32.mrb[0].mxu0
    %289 = vmatprep.mubr.bf16.mxu0 0
    %290 = vmatmul.mubr.bf16.gmra.mrb[0].mxu0 %v236
    %v291 = vpop.f32.mrb[0].mxu0
    %v292 = vadd.f32 %v215, %v291
    %v293 = vpop.f32.mrb[0].mxu0
    %v294 = vpop.f32.mrb[0].mxu0
    %v295 = vadd.f32 %v218, %v294
    %v296 = vpop.f32.mrb[0].mxu0
    %297 = vmatprep.mubr.bf16.mxu0 0
    %298 = vmatmul.mubr.bf16.gmra.mrb[0].mxu0 %v239
    %v299 = vpop.f32.mrb[0].mxu0
    %v300 = vadd.f32 %v223, %v299
    %v301 = vpop.f32.mrb[0].mxu0
    %v302 = vpop.f32.mrb[0].mxu0
    %v303 = vadd.f32 %v226, %v302
    %v304 = vpop.f32.mrb[0].mxu0
    %305 = vdwg.mxu0
    %v307 = vsel %vm151, %v141, 0
    %v310 = vsel %vm151, %v142, 0
    %v313 = vsel %vm151, %v143, 0
    %v316 = vsel %vm151, %v144, 0
    %318 = vmatprep.subr.bf16.mxu0 0
    %319 = vmatpush1.bf16.msra.mxu0 %v149
    %320 = vmatprep.subr.bf16.mxu0 0
    %321 = vmatpush1.bf16.msra.mxu0 0
    %322 = vmatprep.subr.bf16.mxu0 0
    %323 = vmatpush1.bf16.msra.mxu0 0
    %324 = vmatprep.subr.bf16.mxu0 0
    %325 = vmatpush1.bf16.msra.mxu0 0
    %326 = vmatprep.subr.bf16.mxu0 0
    %327 = vmatpush1.bf16.msra.mxu0 0
    %328 = vmatprep.subr.bf16.mxu0 0
    %329 = vmatpush1.bf16.msra.mxu0 0
    %330 = vmatprep.subr.bf16.mxu0 0
    %331 = vmatpush1.bf16.msra.mxu0 0
    %332 = vmatprep.subr.bf16.mxu0 0
    %333 = vmatpush1.bf16.msra.mxu0 0
    %334 = vmatprep.subr.bf16.mxu0 0
    %335 = vmatpush1.bf16.msra.mxu0 0
    %336 = vmatprep.subr.bf16.mxu0 0
    %337 = vmatpush1.bf16.msra.mxu0 0
    %338 = vmatprep.subr.bf16.mxu0 0
    %339 = vmatpush1.bf16.msra.mxu0 0
    %340 = vmatprep.subr.bf16.mxu0 0
    %341 = vmatpush1.bf16.msra.mxu0 0
    %342 = vmatprep.subr.bf16.mxu0 0
    %343 = vmatpush1.bf16.msra.mxu0 0
    %344 = vmatprep.subr.bf16.mxu0 0
    %345 = vmatpush1.bf16.msra.mxu0 0
    %346 = vmatprep.subr.bf16.mxu0 0
    %347 = vmatpush1.bf16.msra.mxu0 0
    %348 = vmatprep.subr.bf16.mxu0 0
    %349 = vmatpush1.bf16.msra.mxu0 0
    %350 = vmatprep.mubr.bf16.mxu0 0
    %351 = vmatmul.mubr.bf16.gmra.mrb[0].mxu0 %v307
    %v352 = vpop.f32.mrb[0].mxu0
    %v353 = vadd.f32 0.0, %v352
    %v354 = vpop.f32.mrb[0].mxu0
    %v355 = vpop.f32.mrb[0].mxu0
    %v356 = vadd.f32 0.0, %v355
    %v357 = vpop.f32.mrb[0].mxu0
    %358 = vmatprep.mubr.bf16.mxu0 0
    %359 = vmatmul.mubr.bf16.gmra.mrb[0].mxu0 %v310
    %v360 = vpop.f32.mrb[0].mxu0
    %v361 = vadd.f32 0.0, %v360
    %v362 = vpop.f32.mrb[0].mxu0
    %v363 = vpop.f32.mrb[0].mxu0
    %v364 = vadd.f32 0.0, %v363
    %v365 = vpop.f32.mrb[0].mxu0
    %366 = vmatprep.mubr.bf16.mxu0 0
    %367 = vmatmul.mubr.bf16.gmra.mrb[0].mxu0 %v313
    %v368 = vpop.f32.mrb[0].mxu0
    %v369 = vadd.f32 0.0, %v368
    %v370 = vpop.f32.mrb[0].mxu0
    %v371 = vpop.f32.mrb[0].mxu0
    %v372 = vadd.f32 0.0, %v371
    %v373 = vpop.f32.mrb[0].mxu0
    %374 = vmatprep.mubr.bf16.mxu0 0
    %375 = vmatmul.mubr.bf16.gmra.mrb[0].mxu0 %v316
    %v376 = vpop.f32.mrb[0].mxu0
    %v377 = vadd.f32 0.0, %v376
    %v378 = vpop.f32.mrb[0].mxu0
    %v379 = vpop.f32.mrb[0].mxu0
    %v380 = vadd.f32 0.0, %v379
    %v381 = vpop.f32.mrb[0].mxu0
    %382 = vdwg.mxu0
    %v383 = vadd.f32 %v276, %v353
    %v384 = vadd.f32 %v279, %v356
    %v385 = vadd.f32 %v284, %v361
    %v386 = vadd.f32 %v287, %v364
    %v387 = vadd.f32 %v292, %v369
    %v388 = vadd.f32 %v295, %v372
    %v389 = vadd.f32 %v300, %v377
    %v390 = vadd.f32 %v303, %v380
    %v391 = vpack.c.bf16 %v94, %v93
    %v392 = vpack.c.bf16 %v96, %v95
    %v393 = vpack.c.bf16 %v98, %v97
    %v394 = vpack.c.bf16 %v100, %v99
    %v395 = vunpack.c.l.bf16 %v391
    %v396 = vunpack.c.h.bf16 %v391
    %v397 = vunpack.c.l.bf16 %v392
    %v398 = vunpack.c.h.bf16 %v392
    %v399 = vunpack.c.l.bf16 %v393
    %v400 = vunpack.c.h.bf16 %v393
    %v401 = vunpack.c.l.bf16 %v394
    %v402 = vunpack.c.h.bf16 %v394
    %v403 = vsub.f32 %v93, %v395
    %v404 = vsub.f32 %v94, %v396
    %v405 = vsub.f32 %v95, %v397
    %v406 = vsub.f32 %v96, %v398
    %v407 = vsub.f32 %v97, %v399
    %v408 = vsub.f32 %v98, %v400
    %v409 = vsub.f32 %v99, %v401
    %v410 = vsub.f32 %v100, %v402
    %v411 = vpack.c.bf16 %v404, %v403
    %v412 = vpack.c.bf16 %v406, %v405
    %v413 = vpack.c.bf16 %v408, %v407
    %v414 = vpack.c.bf16 %v410, %v409
    %v415 = vunpack.c.l.bf16 %v411
    %v416 = vunpack.c.h.bf16 %v411
    %v417 = vunpack.c.l.bf16 %v412
    %v418 = vunpack.c.h.bf16 %v412
    %v419 = vunpack.c.l.bf16 %v413
    %v420 = vunpack.c.h.bf16 %v413
    %v421 = vunpack.c.l.bf16 %v414
    %v422 = vunpack.c.h.bf16 %v414
    %v423 = vsub.f32 %v403, %v415
    %v424 = vsub.f32 %v404, %v416
    %v425 = vsub.f32 %v405, %v417
    %v426 = vsub.f32 %v406, %v418
    %v427 = vsub.f32 %v407, %v419
    %v428 = vsub.f32 %v408, %v420
    %v429 = vsub.f32 %v409, %v421
    %v430 = vsub.f32 %v410, %v422
    %v431 = vpack.c.bf16 %v424, %v423
    %v432 = vpack.c.bf16 %v426, %v425
    %v433 = vpack.c.bf16 %v428, %v427
    %v434 = vpack.c.bf16 %v430, %v429
    %439 = vrot.lane.b32.xlu0 %v411, 112
    %v440 = vpop.permute.xlu0 %439
    %441 = vrot.lane.b32.xlu0 %v412, 112
    %v442 = vpop.permute.xlu0 %441
    %443 = vrot.lane.b32.xlu0 %v413, 112
    %v444 = vpop.permute.xlu0 %443
    %445 = vrot.lane.b32.xlu0 %v414, 112
    %v446 = vpop.permute.xlu0 %445
    %v448 = vsel %vm151, %v440, 0
    %v451 = vsel %vm151, %v442, 0
    %v454 = vsel %vm151, %v444, 0
    %v457 = vsel %vm151, %v446, 0
    %459 = vmatprep.subr.bf16.mxu0 0
    %460 = vmatpush1.bf16.msra.mxu0 %v149
    %461 = vmatprep.subr.bf16.mxu0 0
    %462 = vmatpush1.bf16.msra.mxu0 0
    %463 = vmatprep.subr.bf16.mxu0 0
    %464 = vmatpush1.bf16.msra.mxu0 0
    %465 = vmatprep.subr.bf16.mxu0 0
    %466 = vmatpush1.bf16.msra.mxu0 0
    %467 = vmatprep.subr.bf16.mxu0 0
    %468 = vmatpush1.bf16.msra.mxu0 0
    %469 = vmatprep.subr.bf16.mxu0 0
    %470 = vmatpush1.bf16.msra.mxu0 0
    %471 = vmatprep.subr.bf16.mxu0 0
    %472 = vmatpush1.bf16.msra.mxu0 0
    %473 = vmatprep.subr.bf16.mxu0 0
    %474 = vmatpush1.bf16.msra.mxu0 0
    %475 = vmatprep.subr.bf16.mxu0 0
    %476 = vmatpush1.bf16.msra.mxu0 0
    %477 = vmatprep.subr.bf16.mxu0 0
    %478 = vmatpush1.bf16.msra.mxu0 0
    %479 = vmatprep.subr.bf16.mxu0 0
    %480 = vmatpush1.bf16.msra.mxu0 0
    %481 = vmatprep.subr.bf16.mxu0 0
    %482 = vmatpush1.bf16.msra.mxu0 0
    %483 = vmatprep.subr.bf16.mxu0 0
    %484 = vmatpush1.bf16.msra.mxu0 0
    %485 = vmatprep.subr.bf16.mxu0 0
    %486 = vmatpush1.bf16.msra.mxu0 0
    %487 = vmatprep.subr.bf16.mxu0 0
    %488 = vmatpush1.bf16.msra.mxu0 0
    %489 = vmatprep.subr.bf16.mxu0 0
    %490 = vmatpush1.bf16.msra.mxu0 0
    %491 = vmatprep.mubr.bf16.mxu0 0
    %492 = vmatmul.mubr.bf16.gmra.mrb[0].mxu0 %v448
    %v493 = vpop.f32.mrb[0].mxu0
    %v494 = vadd.f32 0.0, %v493
    %v495 = vpop.f32.mrb[0].mxu0
    %v496 = vpop.f32.mrb[0].mxu0
    %v497 = vadd.f32 0.0, %v496
    %v498 = vpop.f32.mrb[0].mxu0
    %499 = vmatprep.mubr.bf16.mxu0 0
    %500 = vmatmul.mubr.bf16.gmra.mrb[0].mxu0 %v451
    %v501 = vpop.f32.mrb[0].mxu0
    %v502 = vadd.f32 0.0, %v501
    %v503 = vpop.f32.mrb[0].mxu0
    %v504 = vpop.f32.mrb[0].mxu0
    %v505 = vadd.f32 0.0, %v504
    %v506 = vpop.f32.mrb[0].mxu0
    %507 = vmatprep.mubr.bf16.mxu0 0
    %508 = vmatmul.mubr.bf16.gmra.mrb[0].mxu0 %v454
    %v509 = vpop.f32.mrb[0].mxu0
    %v510 = vadd.f32 0.0, %v509
    %v511 = vpop.f32.mrb[0].mxu0
    %v512 = vpop.f32.mrb[0].mxu0
    %v513 = vadd.f32 0.0, %v512
    %v514 = vpop.f32.mrb[0].mxu0
    %515 = vmatprep.mubr.bf16.mxu0 0
    %516 = vmatmul.mubr.bf16.gmra.mrb[0].mxu0 %v457
    %v517 = vpop.f32.mrb[0].mxu0
    %v518 = vadd.f32 0.0, %v517
    %v519 = vpop.f32.mrb[0].mxu0
    %v520 = vpop.f32.mrb[0].mxu0
    %v521 = vadd.f32 0.0, %v520
    %v522 = vpop.f32.mrb[0].mxu0
    %523 = vdwg.mxu0
    %528 = vrot.lane.b32.xlu0 %v391, 112
    %v529 = vpop.permute.xlu0 %528
    %530 = vrot.lane.b32.xlu0 %v392, 112
    %v531 = vpop.permute.xlu0 %530
    %532 = vrot.lane.b32.xlu0 %v393, 112
    %v533 = vpop.permute.xlu0 %532
    %534 = vrot.lane.b32.xlu0 %v394, 112
    %v535 = vpop.permute.xlu0 %534
    %v537 = vsel %vm151, %v529, 0
    %v540 = vsel %vm151, %v531, 0
    %v543 = vsel %vm151, %v533, 0
    %v546 = vsel %vm151, %v535, 0
    %548 = vmatprep.subr.bf16.mxu0 0
    %549 = vmatpush1.bf16.msra.mxu0 %v149
    %550 = vmatprep.subr.bf16.mxu0 0
    %551 = vmatpush1.bf16.msra.mxu0 0
    %552 = vmatprep.subr.bf16.mxu0 0
    %553 = vmatpush1.bf16.msra.mxu0 0
    %554 = vmatprep.subr.bf16.mxu0 0
    %555 = vmatpush1.bf16.msra.mxu0 0
    %556 = vmatprep.subr.bf16.mxu0 0
    %557 = vmatpush1.bf16.msra.mxu0 0
    %558 = vmatprep.subr.bf16.mxu0 0
    %559 = vmatpush1.bf16.msra.mxu0 0
    %560 = vmatprep.subr.bf16.mxu0 0
    %561 = vmatpush1.bf16.msra.mxu0 0
    %562 = vmatprep.subr.bf16.mxu0 0
    %563 = vmatpush1.bf16.msra.mxu0 0
    %564 = vmatprep.subr.bf16.mxu0 0
    %565 = vmatpush1.bf16.msra.mxu0 0
    %566 = vmatprep.subr.bf16.mxu0 0
    %567 = vmatpush1.bf16.msra.mxu0 0
    %568 = vmatprep.subr.bf16.mxu0 0
    %569 = vmatpush1.bf16.msra.mxu0 0
    %570 = vmatprep.subr.bf16.mxu0 0
    %571 = vmatpush1.bf16.msra.mxu0 0
    %572 = vmatprep.subr.bf16.mxu0 0
    %573 = vmatpush1.bf16.msra.mxu0 0
    %574 = vmatprep.subr.bf16.mxu0 0
    %575 = vmatpush1.bf16.msra.mxu0 0
    %576 = vmatprep.subr.bf16.mxu0 0
    %577 = vmatpush1.bf16.msra.mxu0 0
    %578 = vmatprep.subr.bf16.mxu0 0
    %579 = vmatpush1.bf16.msra.mxu0 0
    %580 = vmatprep.mubr.bf16.mxu0 0
    %581 = vmatmul.mubr.bf16.gmra.mrb[0].mxu0 %v537
    %v582 = vpop.f32.mrb[0].mxu0
    %v583 = vadd.f32 %v494, %v582
    %v584 = vpop.f32.mrb[0].mxu0
    %v585 = vpop.f32.mrb[0].mxu0
    %v586 = vadd.f32 %v497, %v585
    %v587 = vpop.f32.mrb[0].mxu0
    %588 = vmatprep.mubr.bf16.mxu0 0
    %589 = vmatmul.mubr.bf16.gmra.mrb[0].mxu0 %v540
    %v590 = vpop.f32.mrb[0].mxu0
    %v591 = vadd.f32 %v502, %v590
    %v592 = vpop.f32.mrb[0].mxu0
    %v593 = vpop.f32.mrb[0].mxu0
    %v594 = vadd.f32 %v505, %v593
    %v595 = vpop.f32.mrb[0].mxu0
    %596 = vmatprep.mubr.bf16.mxu0 0
    %597 = vmatmul.mubr.bf16.gmra.mrb[0].mxu0 %v543
    %v598 = vpop.f32.mrb[0].mxu0
    %v599 = vadd.f32 %v510, %v598
    %v600 = vpop.f32.mrb[0].mxu0
    %v601 = vpop.f32.mrb[0].mxu0
    %v602 = vadd.f32 %v513, %v601
    %v603 = vpop.f32.mrb[0].mxu0
    %604 = vmatprep.mubr.bf16.mxu0 0
    %605 = vmatmul.mubr.bf16.gmra.mrb[0].mxu0 %v546
    %v606 = vpop.f32.mrb[0].mxu0
    %v607 = vadd.f32 %v518, %v606
    %v608 = vpop.f32.mrb[0].mxu0
    %v609 = vpop.f32.mrb[0].mxu0
    %v610 = vadd.f32 %v521, %v609
    %v611 = vpop.f32.mrb[0].mxu0
    %612 = vdwg.mxu0
    %617 = vrot.lane.b32.xlu0 %v431, 112
    %v618 = vpop.permute.xlu0 %617
    %619 = vrot.lane.b32.xlu0 %v432, 112
    %v620 = vpop.permute.xlu0 %619
    %621 = vrot.lane.b32.xlu0 %v433, 112
    %v622 = vpop.permute.xlu0 %621
    %623 = vrot.lane.b32.xlu0 %v434, 112
    %v624 = vpop.permute.xlu0 %623
    %v626 = vsel %vm151, %v618, 0
    %v629 = vsel %vm151, %v620, 0
    %v632 = vsel %vm151, %v622, 0
    %v635 = vsel %vm151, %v624, 0
    %637 = vmatprep.subr.bf16.mxu0 0
    %638 = vmatpush1.bf16.msra.mxu0 %v149
    %639 = vmatprep.subr.bf16.mxu0 0
    %640 = vmatpush1.bf16.msra.mxu0 0
    %641 = vmatprep.subr.bf16.mxu0 0
    %642 = vmatpush1.bf16.msra.mxu0 0
    %643 = vmatprep.subr.bf16.mxu0 0
    %644 = vmatpush1.bf16.msra.mxu0 0
    %645 = vmatprep.subr.bf16.mxu0 0
    %646 = vmatpush1.bf16.msra.mxu0 0
    %647 = vmatprep.subr.bf16.mxu0 0
    %648 = vmatpush1.bf16.msra.mxu0 0
    %649 = vmatprep.subr.bf16.mxu0 0
    %650 = vmatpush1.bf16.msra.mxu0 0
    %651 = vmatprep.subr.bf16.mxu0 0
    %652 = vmatpush1.bf16.msra.mxu0 0
    %653 = vmatprep.subr.bf16.mxu0 0
    %654 = vmatpush1.bf16.msra.mxu0 0
    %655 = vmatprep.subr.bf16.mxu0 0
    %656 = vmatpush1.bf16.msra.mxu0 0
    %657 = vmatprep.subr.bf16.mxu0 0
    %658 = vmatpush1.bf16.msra.mxu0 0
    %659 = vmatprep.subr.bf16.mxu0 0
    %660 = vmatpush1.bf16.msra.mxu0 0
    %661 = vmatprep.subr.bf16.mxu0 0
    %662 = vmatpush1.bf16.msra.mxu0 0
    %663 = vmatprep.subr.bf16.mxu0 0
    %664 = vmatpush1.bf16.msra.mxu0 0
    %665 = vmatprep.subr.bf16.mxu0 0
    %666 = vmatpush1.bf16.msra.mxu0 0
    %667 = vmatprep.subr.bf16.mxu0 0
    %668 = vmatpush1.bf16.msra.mxu0 0
    %669 = vmatprep.mubr.bf16.mxu0 0
    %670 = vmatmul.mubr.bf16.gmra.mrb[0].mxu0 %v626
    %v671 = vpop.f32.mrb[0].mxu0
    %v672 = vadd.f32 0.0, %v671
    %v673 = vpop.f32.mrb[0].mxu0
    %v674 = vpop.f32.mrb[0].mxu0
    %v675 = vadd.f32 0.0, %v674
    %v676 = vpop.f32.mrb[0].mxu0
    %677 = vmatprep.mubr.bf16.mxu0 0
    %678 = vmatmul.mubr.bf16.gmra.mrb[0].mxu0 %v629
    %v679 = vpop.f32.mrb[0].mxu0
    %v680 = vadd.f32 0.0, %v679
    %v681 = vpop.f32.mrb[0].mxu0
    %v682 = vpop.f32.mrb[0].mxu0
    %v683 = vadd.f32 0.0, %v682
    %v684 = vpop.f32.mrb[0].mxu0
    %685 = vmatprep.mubr.bf16.mxu0 0
    %686 = vmatmul.mubr.bf16.gmra.mrb[0].mxu0 %v632
    %v687 = vpop.f32.mrb[0].mxu0
    %v688 = vadd.f32 0.0, %v687
    %v689 = vpop.f32.mrb[0].mxu0
    %v690 = vpop.f32.mrb[0].mxu0
    %v691 = vadd.f32 0.0, %v690
    %v692 = vpop.f32.mrb[0].mxu0
    %693 = vmatprep.mubr.bf16.mxu0 0
    %694 = vmatmul.mubr.bf16.gmra.mrb[0].mxu0 %v635
    %v695 = vpop.f32.mrb[0].mxu0
    %v696 = vadd.f32 0.0, %v695
    %v697 = vpop.f32.mrb[0].mxu0
    %v698 = vpop.f32.mrb[0].mxu0
    %v699 = vadd.f32 0.0, %v698
    %v700 = vpop.f32.mrb[0].mxu0
    %701 = vdwg.mxu0
    %v702 = vadd.f32 %v583, %v672
    %v703 = vadd.f32 %v586, %v675
    %v704 = vadd.f32 %v591, %v680
    %v705 = vadd.f32 %v594, %v683
    %v706 = vadd.f32 %v599, %v688
    %v707 = vadd.f32 %v602, %v691
    %v708 = vadd.f32 %v607, %v696
    %v709 = vadd.f32 %v610, %v699
    %vm710 = vcmask 64512
    %711 = vst.msk [vmem:[#allocation2] sm:$0xff] %vm710, %v383
    %712 = vst.msk [vmem:[#allocation2 + $0x8] sm:$0xff] %vm710, %v384
    %713 = vst.msk [vmem:[#allocation2 + $0x10] sm:$0xff] %vm710, %v385
    %714 = vst.msk [vmem:[#allocation2 + $0x18] sm:$0xff] %vm710, %v386
    %715 = vst.msk [vmem:[#allocation2 + $0x20] sm:$0xff] %vm710, %v387
    %716 = vst.msk [vmem:[#allocation2 + $0x28] sm:$0xff] %vm710, %v388
    %717 = vst.msk [vmem:[#allocation2 + $0x30] sm:$0xff] %vm710, %v389
    %718 = vst.msk [vmem:[#allocation2 + $0x38] sm:$0xff] %vm710, %v390
    %727 = vrot.lane.b32.xlu0 %v383, 120
    %v728 = vpop.permute.xlu0 %727
    %729 = vrot.lane.b32.xlu0 %v384, 120
    %v730 = vpop.permute.xlu0 %729
    %731 = vrot.lane.b32.xlu0 %v385, 120
    %v732 = vpop.permute.xlu0 %731
    %733 = vrot.lane.b32.xlu0 %v386, 120
    %v734 = vpop.permute.xlu0 %733
    %735 = vrot.lane.b32.xlu0 %v387, 120
    %v736 = vpop.permute.xlu0 %735
    %737 = vrot.lane.b32.xlu0 %v388, 120
    %v738 = vpop.permute.xlu0 %737
    %739 = vrot.lane.b32.xlu0 %v389, 120
    %v740 = vpop.permute.xlu0 %739
    %741 = vrot.lane.b32.xlu0 %v390, 120
    %v742 = vpop.permute.xlu0 %741
    %751 = vst.msk [vmem:[#allocation4] sm:$0xff] %vm710, %v728
    %752 = vst.msk [vmem:[#allocation4 + $0x8] sm:$0xff] %vm710, %v730
    %753 = vst.msk [vmem:[#allocation4 + $0x10] sm:$0xff] %vm710, %v732
    %754 = vst.msk [vmem:[#allocation4 + $0x18] sm:$0xff] %vm710, %v734
    %755 = vst.msk [vmem:[#allocation4 + $0x20] sm:$0xff] %vm710, %v736
    %756 = vst.msk [vmem:[#allocation4 + $0x28] sm:$0xff] %vm710, %v738
    %757 = vst.msk [vmem:[#allocation4 + $0x30] sm:$0xff] %vm710, %v740
    %758 = vst.msk [vmem:[#allocation4 + $0x38] sm:$0xff] %vm710, %v742
    %759 = vst.msk [vmem:[#allocation6] sm:$0xff] %vm710, %v702
    %760 = vst.msk [vmem:[#allocation6 + $0x8] sm:$0xff] %vm710, %v703
    %761 = vst.msk [vmem:[#allocation6 + $0x10] sm:$0xff] %vm710, %v704
    %762 = vst.msk [vmem:[#allocation6 + $0x18] sm:$0xff] %vm710, %v705
    %763 = vst.msk [vmem:[#allocation6 + $0x20] sm:$0xff] %vm710, %v706
    %764 = vst.msk [vmem:[#allocation6 + $0x28] sm:$0xff] %vm710, %v707
    %765 = vst.msk [vmem:[#allocation6 + $0x30] sm:$0xff] %vm710, %v708
    %766 = vst.msk [vmem:[#allocation6 + $0x38] sm:$0xff] %vm710, %v709
    %775 = vrot.lane.b32.xlu0 %v702, 120
    %v776 = vpop.permute.xlu0 %775
    %777 = vrot.lane.b32.xlu0 %v703, 120
    %v778 = vpop.permute.xlu0 %777
    %779 = vrot.lane.b32.xlu0 %v704, 120
    %v780 = vpop.permute.xlu0 %779
    %781 = vrot.lane.b32.xlu0 %v705, 120
    %v782 = vpop.permute.xlu0 %781
    %783 = vrot.lane.b32.xlu0 %v706, 120
    %v784 = vpop.permute.xlu0 %783
    %785 = vrot.lane.b32.xlu0 %v707, 120
    %v786 = vpop.permute.xlu0 %785
    %787 = vrot.lane.b32.xlu0 %v708, 120
    %v788 = vpop.permute.xlu0 %787
    %789 = vrot.lane.b32.xlu0 %v709, 120
    %v790 = vpop.permute.xlu0 %789
    %799 = vst.msk [vmem:[#allocation7] sm:$0xff] %vm710, %v776
    %800 = vst.msk [vmem:[#allocation7 + $0x8] sm:$0xff] %vm710, %v778
    %801 = vst.msk [vmem:[#allocation7 + $0x10] sm:$0xff] %vm710, %v780
    %802 = vst.msk [vmem:[#allocation7 + $0x18] sm:$0xff] %vm710, %v782
    %803 = vst.msk [vmem:[#allocation7 + $0x20] sm:$0xff] %vm710, %v784
    %804 = vst.msk [vmem:[#allocation7 + $0x28] sm:$0xff] %vm710, %v786
    %805 = vst.msk [vmem:[#allocation7 + $0x30] sm:$0xff] %vm710, %v788
    %806 = vst.msk [vmem:[#allocation7 + $0x38] sm:$0xff] %vm710, %v790
    // Predicated region
    $region10: #{_dwt_impl.1} parent=1 // pred_check
      _
    $region11: #{_dwt_impl.1} parent=1 // pred_check_branch
      %808 = sbr.rel (0) target = $region13
    $region12: #{_dwt_impl.1} parent=1 // pred_region
      %s810 = ssub.s32 1024, 1024
      %811 = vsyncadd [#allocation3], %s810
      %s812 = sshll.u32 [#allocation2], 4
      %s813 = int_to_ptr.vmem [resolvable:$true] %s812
      %818 = dma.vmem_to_hbm [thread:$0]  %s813, 1024, %s2, [#allocation3], 128, 128, 8
    $region13: #{_dwt_impl.1} parent=1 // pred_fallthru
      _
    // Predicated region
    $region14: #{_dwt_impl.1} parent=1 // pred_check
      _
    $region15: #{_dwt_impl.1} parent=1 // pred_check_branch
      %820 = sbr.rel (0) target = $region17
    $region16: #{_dwt_impl.1} parent=1 // pred_region
      %s822 = ssub.s32 1024, 1024
      %823 = vsyncadd [#allocation5], %s822
      %s824 = sshll.u32 [#allocation4], 4
      %s825 = int_to_ptr.vmem [resolvable:$true] %s824
      %830 = dma.vmem_to_hbm [thread:$0]  %s825, 1024, %s3, [#allocation5], 128, 128, 8
    $region17: #{_dwt_impl.1} parent=1 // pred_fallthru
      _
    // Predicated region
    $region18: #{_dwt_impl.1} parent=1 // pred_check
      _
    $region19: #{_dwt_impl.1} parent=1 // pred_check_branch
      %832 = sbr.rel (0) target = $region21
    $region20: #{_dwt_impl.1} parent=1 // pred_region
      %s834 = ssub.s32 1024, 1024
      %835 = vsyncadd [#allocation5], %s834
      %s836 = sshll.u32 [#allocation6], 4
      %s837 = int_to_ptr.vmem [resolvable:$true] %s836
      %842 = dma.vmem_to_hbm [thread:$0]  %s837, 1024, %s4, [#allocation5], 128, 128, 8
    $region21: #{_dwt_impl.1} parent=1 // pred_fallthru
      _
    // Predicated region
    $region22: #{_dwt_impl.1} parent=1 // pred_check
      _
    $region23: #{_dwt_impl.1} parent=1 // pred_check_branch
      %844 = sbr.rel (0) target = $region25
    $region24: #{_dwt_impl.1} parent=1 // pred_region
      %s846 = ssub.s32 1024, 1024
      %847 = vsyncadd [#allocation8], %s846
      %s848 = sshll.u32 [#allocation7], 4
      %s849 = int_to_ptr.vmem [resolvable:$true] %s848
      %854 = dma.vmem_to_hbm [thread:$0]  %s849, 1024, %s5, [#allocation8], 128, 128, 8
    $region25: #{_dwt_impl.1} parent=1 // pred_fallthru
      _
    // Predicated region
    $region26: #{_dwt_impl.1} parent=1 // pred_check
      _
    $region27: #{_dwt_impl.1} parent=1 // pred_check_branch
      %856 = sbr.rel (0) target = $region29
    $region28: #{_dwt_impl.1} parent=1 // pred_region
      %857 = dma.done [#allocation3], 1024
    $region29: #{_dwt_impl.1} parent=1 // pred_fallthru
      _
    // Predicated region
    $region30: #{_dwt_impl.1} parent=1 // pred_check
      _
    $region31: #{_dwt_impl.1} parent=1 // pred_check_branch
      %859 = sbr.rel (0) target = $region33
    $region32: #{_dwt_impl.1} parent=1 // pred_region
      %860 = dma.done [#allocation5], 1024
    $region33: #{_dwt_impl.1} parent=1 // pred_fallthru
      _
    // Predicated region
    $region34: #{_dwt_impl.1} parent=1 // pred_check
      _
    $region35: #{_dwt_impl.1} parent=1 // pred_check_branch
      %862 = sbr.rel (0) target = $region37
    $region36: #{_dwt_impl.1} parent=1 // pred_region
      %863 = dma.done [#allocation5], 1024
    $region37: #{_dwt_impl.1} parent=1 // pred_fallthru
      _
    // Predicated region
    $region38: #{_dwt_impl.1} parent=1 // pred_check
      _
    $region39: #{_dwt_impl.1} parent=1 // pred_check_branch
      %865 = sbr.rel (0) target = $region41
    $region40: #{_dwt_impl.1} parent=1 // pred_region
      %866 = dma.done [#allocation8], 1024
    $region41: #{_dwt_impl.1} parent=1 // pred_fallthru
      _
    %867 = vsyncpa [#allocation3], 1
    %868 = vsyncpa [#allocation5], 1
    %869 = vsyncpa [#allocation8], 1

</llo_original>
